<compile_context>
chip_gen: v7x
topology: tpu7x:2x2x1
jax: 0.10.0
libtpu: 0.0.40
codegen_flags: <defaults>
</compile_context>

<pallas_src>
import functools

import jax
import jax.numpy as jnp
from jax.experimental import pallas as pl
from jax.experimental.pallas import tpu as pltpu


def _swisht_a_kernel(x_ref, o_ref, *, alpha, compute_dtype):
    # Pure elementwise tile: x_ref / o_ref are VMEM blocks of identical shape.
    x = x_ref[...].astype(compute_dtype)
    # sigmoid(x) = 0.5 * (tanh(0.5 * x) + 1)  -> single EUP op (vs exp + divide).
    sig = 0.5 * (jnp.tanh(0.5 * x) + 1.0)
    y = sig * (x + 2.0 * alpha) - alpha
    o_ref[...] = y.astype(o_ref.dtype)


def swisht_a(x, alpha=0.1, *, tile_rows=2048, compute_dtype=jnp.float32,
             donate_input=False):
    """Elementwise SwishT_A: sigmoid(x) * (x + 2*alpha) - alpha.

    x             : any shape / float dtype (e.g. NCHW conv activations)
    alpha         : python float (non-learnable, matches the nn.Module)
    compute_dtype : in-kernel compute dtype; f32 is safe on all generations.
                    Pass jnp.bfloat16 for bf16 inputs on v6e/v7x.
    """
    orig_shape = x.shape
    orig_dtype = x.dtype
    n = x.size
    if n == 0:
        return x

    kernel = functools.partial(
        _swisht_a_kernel, alpha=float(alpha), compute_dtype=compute_dtype)

    itemsize = jnp.dtype(orig_dtype).itemsize
    cost = pl.CostEstimate(flops=6 * n, transcendentals=n,
                           bytes_accessed=2 * n * itemsize)
    cparams = pltpu.CompilerParams(
        dimension_semantics=("parallel",),       # shards grid across v7x's 2 TCs
        vmem_limit_bytes=32 * 1024 * 1024,       # 4 MiB blocks x 2 arrays x 2 bufs
    )
    io_alias = {0: 0} if donate_input else {}

    x_flat = jnp.ravel(x)  # free for a dense array; no data movement

    # ---- Fast path: lane-dense 2-D slab, no padding needed. -----------------
    lane = None
    for cand in (512, 256, 128):
        if n % cand == 0:
            lane = cand
            break

    if lane is not None:
        rows = n // lane
        x2d = x_flat.reshape(rows, lane)
        if rows < 32:
            block_rows = rows                    # single full block (always legal)
        else:
            # >= ~4 grid steps so pipelining / megacore sharding have work,
            # 8-row aligned, capped at tile_rows (~4 MiB f32 blocks at lane=512).
            block_rows = min(tile_rows, max(8, (rows // 4) // 8 * 8))
        grid = (pl.cdiv(rows, block_rows),)      # partial last block is masked

        out2d = pl.pallas_call(
            kernel,
            out_shape=jax.ShapeDtypeStruct((rows, lane), orig_dtype),
            grid=grid,
            in_specs=[pl.BlockSpec((block_rows, lane), lambda i: (i, 0))],
            out_specs=pl.BlockSpec((block_rows, lane), lambda i: (i, 0)),
            compiler_params=cparams,
            cost_estimate=cost,
            input_output_aliases=io_alias,
        )(x2d)
        return out2d.reshape(orig_shape)

    # ---- Ragged path: 1-D blocks directly on the flat array. ----------------
    # No host pad / slice: block is a multiple of 8*128 and Pallas masks the
    # partial final block (OOB writes are dropped; garbage reads are harmless
    # for a pure elementwise op).
    if n <= 4096:
        blk = n                                  # full-array block (always legal)
    else:
        blk = min(128 * 1024, max(1024, (n // 4) // 1024 * 1024))
    grid = (pl.cdiv(n, blk),)

    out_flat = pl.pallas_call(
        kernel,
        out_shape=jax.ShapeDtypeStruct((n,), orig_dtype),
        grid=grid,
        in_specs=[pl.BlockSpec((blk,), lambda i: (i,))],
        out_specs=pl.BlockSpec((blk,), lambda i: (i,)),
        compiler_params=cparams,
        cost_estimate=cost,
        input_output_aliases=io_alias,
    )(x_flat)
    return out_flat.reshape(orig_shape)


if __name__ == "__main__":
    alpha = 0.1

    # Small NCHW input, as a conv-style activation input (2*4*16*16 = 2048).
    x = jax.random.normal(jax.random.PRNGKey(0), (2, 4, 16, 16), dtype=jnp.float32)
    y = jax.block_until_ready(swisht_a(x, alpha))
    y_ref = jax.nn.sigmoid(x) * (x + 2.0 * alpha) - alpha
    assert y.shape == x.shape and y.dtype == x.dtype
    assert jnp.allclose(y, y_ref, atol=1e-5, rtol=1e-5)

    # Ragged shape (105 elements) exercising the pad-free 1-D fallback path.
    x2 = jax.random.normal(jax.random.PRNGKey(1), (3, 5, 7), dtype=jnp.float32)
    y2 = jax.block_until_ready(swisht_a(x2, alpha))
    y2_ref = jax.nn.sigmoid(x2) * (x2 + 2.0 * alpha) - alpha
    assert y2.shape == x2.shape and y2.dtype == x2.dtype
    assert jnp.allclose(y2, y2_ref, atol=1e-5, rtol=1e-5)

    print("KERNEL_OK")
</pallas_src>

<mosaic_0001>
module attributes {stable_mosaic.version = 11 : i64} {
  func.func @_swisht_a_kernel(%arg0: i32, %arg1: memref<4x512xf32, #tpu.memory_space<vmem>>, %arg2: memref<4x512xf32, #tpu.memory_space<vmem>>) attributes {dimension_semantics = [#tpu.dimension_semantics<parallel>], iteration_bounds = array<i64: 1>, scalar_prefetch = 0 : i64, scratch_operands = 0 : i64, tpu.core_type = #tpu.core_type<tc>, window_params = [{transform_indices = @transform_0, window_bounds = array<i64: 4, 512>}, {transform_indices = @transform_1, window_bounds = array<i64: 4, 512>}]} {
    %c0 = arith.constant 0 : index
    %c0_0 = arith.constant 0 : index
    %0 = vector.load %arg1[%c0, %c0_0] : memref<4x512xf32, #tpu.memory_space<vmem>>, vector<4x512xf32>
    %cst = arith.constant 5.000000e-01 : f32
    %1 = vector.broadcast %cst : f32 to vector<4x512xf32>
    %2 = arith.mulf %1, %0 : vector<4x512xf32>
    %3 = math.tanh %2 : vector<4x512xf32>
    %cst_1 = arith.constant 1.000000e+00 : f32
    %4 = vector.broadcast %cst_1 : f32 to vector<4x512xf32>
    %5 = arith.addf %3, %4 : vector<4x512xf32>
    %cst_2 = arith.constant 5.000000e-01 : f32
    %6 = vector.broadcast %cst_2 : f32 to vector<4x512xf32>
    %7 = arith.mulf %6, %5 : vector<4x512xf32>
    %cst_3 = arith.constant 2.000000e-01 : f32
    %8 = vector.broadcast %cst_3 : f32 to vector<4x512xf32>
    %9 = arith.addf %0, %8 : vector<4x512xf32>
    %10 = arith.mulf %7, %9 : vector<4x512xf32>
    %cst_4 = arith.constant 1.000000e-01 : f32
    %11 = vector.broadcast %cst_4 : f32 to vector<4x512xf32>
    %12 = arith.subf %10, %11 : vector<4x512xf32>
    %c0_5 = arith.constant 0 : index
    %c0_6 = arith.constant 0 : index
    %13 = vector.load %arg2[%c0_5, %c0_6] : memref<4x512xf32, #tpu.memory_space<vmem>>, vector<4x512xf32>
    tpu.vector_store %arg2[%c0_5, %c0_6], %12 {strides = array<i32>} : memref<4x512xf32, #tpu.memory_space<vmem>>, vector<4x512xf32>,
    return
  }
  func.func @transform_0(%arg0: i32) -> (i32, i32) {
    %c0_i32 = arith.constant 0 : i32
    %c0_i32_0 = arith.constant 0 : i32
    return %arg0, %c0_i32 : i32, i32
  }
  func.func @transform_1(%arg0: i32) -> (i32, i32) {
    %c0_i32 = arith.constant 0 : i32
    %c0_i32_0 = arith.constant 0 : i32
    return %arg0, %c0_i32 : i32, i32
  }
}

</mosaic_0001>

<llo_original>
// kernel: tpu_custom_call.1
$region0: #{tpu_custom_call.1}
  #allocation0 [shape = 'u32[]', space=smem, size = 0x4, offset = 0x4, fixed_abs, tag = 'smem constant byte address 0x4 - core index']
  #allocation1 [shape = 'u32[144,128]{1,0:T(1,128)}', space=vmem, size = 0x12000, scoped, tag = 'internal scratch']
  %s0 = inlined_call_operand.hbm [shape: f32[4,512], index: 0, kind: input, shape index: {}]
  %s1 = inlined_call_operand.hbm [shape: f32[4,512], index: 1, kind: output, shape index: {}]
  %s2 = sld [smem:[#allocation0]]
  $region18: #{tpu_custom_call.1} parent=0
    _
  %s4 = ssub.s32 1, %s2
  %s5 = scalar_select 0, %s4, %s2
  $region1: #{tpu_custom_call.1} parent=0
    #allocation2 [shape = 'u8[8192]{0}', space=vmem, size = 0x2000, scoped, tag = 'input window, operand 0, single buffered']
    #allocation3 [shape = 's32[1]{0}', space=sflag, size = 0x4, scoped, tag = 'scoped memory for tpu_custom_call.1']
    #allocation4 [shape = 's32[1]{0}', space=sflag, size = 0x4, scoped, tag = 'scoped memory for tpu_custom_call.1']
    #allocation5 [shape = 'u8[8192]{0}', space=vmem, size = 0x2000, scoped, tag = 'output window, operand 0, single buffered']
    %6 = vsyncpa [#allocation3], 0
    %7 = vsyncpa [#allocation4], 0
    // Predicated region
    $region2: #{tpu_custom_call.1} parent=1 // pred_check
      _
    $region3: #{tpu_custom_call.1} parent=1 // pred_check_branch
      %9 = sbr.rel (0) target = $region5
    $region4: #{tpu_custom_call.1} parent=1 // pred_region
      %s11 = ssub.s32 256, 256
      %12 = vsyncadd [#allocation3], %s11
      %s14 = sshll.u32 [#allocation2], 4
      %s15 = int_to_ptr.vmem [resolvable:$true] %s14
      %17 = dma.hbm_to_vmem [thread:$0]  %s0, 256, %s15, [#allocation3]
    $region5: #{tpu_custom_call.1} parent=1 // pred_fallthru
      _
    // Predicated region
    $region6: #{tpu_custom_call.1} parent=1 // pred_check
      _
    $region7: #{tpu_custom_call.1} parent=1 // pred_check_branch
      %19 = sbr.rel (0) target = $region9
    $region8: #{tpu_custom_call.1} parent=1 // pred_region
      %20 = dma.done [#allocation3], 256
    $region9: #{tpu_custom_call.1} parent=1 // pred_fallthru
      _
    %v21 = vld [vmem:[#allocation2] sm:$0xff]
    %v22 = vld [vmem:[#allocation2 + $0x8] sm:$0xff]
    %v23 = vmul.f32 %v21, 0.5
    %v24 = vmul.f32 %v22, 0.5
    %v25 = vtanh.pop %v23
    %v26 = vtanh.pop %v24
    %v27 = vadd.f32 %v25, 1.0
    %v28 = vadd.f32 %v26, 1.0
    %v29 = vmul.f32 %v27, 0.5
    %v30 = vmul.f32 %v28, 0.5
    %v31 = vadd.f32 %v21, 0.2
    %v32 = vadd.f32 %v22, 0.2
    %v33 = vmul.f32 %v29, %v31
    %v34 = vmul.f32 %v30, %v32
    %v35 = vsub.f32 %v33, 0.1
    %v36 = vsub.f32 %v34, 0.1
    %37 = vst [vmem:[#allocation5] sm:$0xff] %v35
    %38 = vst [vmem:[#allocation5 + $0x8] sm:$0xff] %v36
    // Predicated region
    $region10: #{tpu_custom_call.1} parent=1 // pred_check
      _
    $region11: #{tpu_custom_call.1} parent=1 // pred_check_branch
      %40 = sbr.rel (0) target = $region13
    $region12: #{tpu_custom_call.1} parent=1 // pred_region
      %s42 = ssub.s32 256, 256
      %43 = vsyncadd [#allocation4], %s42
      %s45 = sshll.u32 [#allocation5], 4
      %s46 = int_to_ptr.vmem [resolvable:$true] %s45
      %48 = dma.vmem_to_hbm [thread:$0]  %s46, 256, %s1, [#allocation4]
    $region13: #{tpu_custom_call.1} parent=1 // pred_fallthru
      _
    // Predicated region
    $region14: #{tpu_custom_call.1} parent=1 // pred_check
      _
    $region15: #{tpu_custom_call.1} parent=1 // pred_check_branch
      %50 = sbr.rel (0) target = $region17
    $region16: #{tpu_custom_call.1} parent=1 // pred_region
      %51 = dma.done [#allocation4], 256
    $region17: #{tpu_custom_call.1} parent=1 // pred_fallthru
      _
    %52 = vsyncpa [#allocation3], 1
    %53 = vsyncpa [#allocation4], 1

</llo_original>
